<compile_context>
chip_gen: v7x
topology: tpu7x:2x2x1
jax: 0.10.0
libtpu: 0.0.40
codegen_flags: <defaults>
</compile_context>

<pallas_src>
import math

import jax
import jax.numpy as jnp
from jax.experimental import pallas as pl
from jax.experimental.pallas import tpu as pltpu

EPS = 1e-5
# Per-tile budget accounted in f32 *compute* bytes. ~4 MiB keeps the ~0.35 us
# per-step overhead small (matters most on v7x's fast HBM) while the
# double-buffered in/out tiles plus in-body f32 temps stay well inside v7x's
# 64 MiB VMEM (and trivially inside v5e/v6e's 128 MiB).
_TILE_BUDGET_BYTES = 4 * 1024 * 1024
_COMPUTE_ITEMSIZE = 4  # statistics are always computed in f32


def _gbn_kernel(x_ref, gamma_ref, beta_ref, o_ref):
    # x_ref: (kc, vbs, dt) = kc independent virtual batches; stats over axis=1.
    x = x_ref[...].astype(jnp.float32)
    mean = jnp.mean(x, axis=1, keepdims=True)                       # (kc,1,dt)
    # One-pass biased variance E[x^2] - mean^2: avoids a live full-tile f32
    # `centered` temp. Clamp at 0 to guard catastrophic cancellation when
    # |mean| >> std (rare for normalized activations).
    var = jnp.maximum(jnp.mean(x * x, axis=1, keepdims=True) - mean * mean, 0.0)
    inv_std = jax.lax.rsqrt(var + EPS)                              # EUP, cheap
    # Fold the affine into a single scale/shift: y = x*scale + shift.
    scale = gamma_ref[...].astype(jnp.float32) * inv_std            # (kc,1,dt)
    shift = beta_ref[...].astype(jnp.float32) - mean * scale        # (kc,1,dt)
    o_ref[...] = (x * scale + shift).astype(o_ref.dtype)


def _gbn_tail_kernel(x_ref, gamma_ref, beta_ref, o_ref):
    # Single (smaller) last virtual batch: x_ref is (rem, D), stats over axis=0.
    x = x_ref[...].astype(jnp.float32)
    mean = jnp.mean(x, axis=0, keepdims=True)
    var = jnp.maximum(jnp.mean(x * x, axis=0, keepdims=True) - mean * mean, 0.0)
    inv_std = jax.lax.rsqrt(var + EPS)
    scale = gamma_ref[...].astype(jnp.float32) * inv_std
    shift = beta_ref[...].astype(jnp.float32) - mean * scale
    o_ref[...] = (x * scale + shift).astype(o_ref.dtype)


def _pick_dt(D, vbs):
    """Feature-tile width: full D when it fits (no lane pad needed), else the
    largest 128-multiple divisor of D that fits the budget."""
    if vbs * D * _COMPUTE_ITEMSIZE <= _TILE_BUDGET_BYTES or D % 128 != 0:
        # TODO(synk): a huge D that is not a multiple of 128 falls back to a
        # single full-width tile; vmem_limit below is sized for it.
        return D
    max_dt = max(128, (_TILE_BUDGET_BYTES // (vbs * _COMPUTE_ITEMSIZE)) // 128 * 128)
    n128 = D // 128
    best = 128
    for m in range(1, n128 + 1):
        if n128 % m == 0 and 128 * m <= max_dt:
            best = 128 * m
    return best


def _pick_kc(n_full, vbs, dt, grid_d):
    """Chunk-group size: a divisor of n_full (no batch pad) within the f32
    tile budget, preferring an even total step count (v7x 2-TC balance and
    >=2 steps for pipelining)."""
    kc_max = max(1, _TILE_BUDGET_BYTES // (vbs * dt * _COMPUTE_ITEMSIZE))
    divisors = [d for d in range(1, n_full + 1) if n_full % d == 0 and d <= kc_max]
    if not divisors:
        divisors = [1]
    even = [d for d in divisors if (grid_d * (n_full // d)) % 2 == 0]
    return max(even) if even else max(divisors)


def gbn_forward(x, gamma, beta, virtual_batch_size=128):
    """Ghost BatchNorm forward (training-mode statistics).

    x: (B, D); gamma, beta: (D,). Returns (B, D).
    """
    B, D = x.shape
    itemsize = x.dtype.itemsize

    n_chunks = int(math.ceil(B / virtual_batch_size))
    vbs = int(math.ceil(B / n_chunks))   # torch.chunk chunk size
    n_full = B // vbs                    # number of full-size chunks (>= 1)
    rem = B - n_full * vbs               # ragged last chunk (may be 0)

    # ---- tiling: no padding anywhere ---------------------------------------
    dt = _pick_dt(D, vbs)
    grid_d = D // dt
    kc = _pick_kc(n_full, vbs, dt, grid_d)
    grid_c = n_full // kc

    # ---- main kernel over the full-size chunks -----------------------------
    x3 = x[: n_full * vbs].reshape(n_full, vbs, D) if rem else x.reshape(n_full, vbs, D)
    gamma3 = gamma.reshape(1, 1, D)
    beta3 = beta.reshape(1, 1, D)

    # VMEM sizing: double-buffered in+out tiles (storage dtype) + in-body f32
    # temps (x upcast, fused products) + slack; capped below v7x's 64 MiB.
    tile_store = kc * vbs * dt * itemsize
    tile_f32 = kc * vbs * dt * _COMPUTE_ITEMSIZE
    vmem_limit = min(48 * 1024 * 1024,
                     max(32 * 1024 * 1024, 4 * tile_store + 3 * tile_f32 + (1 << 20)))

    out3 = pl.pallas_call(
        _gbn_kernel,
        out_shape=jax.ShapeDtypeStruct((n_full, vbs, D), x.dtype),
        grid_spec=pl.GridSpec(
            # Feature tiles outer, chunk groups inner: gamma/beta block index
            # is constant along the inner axis (no re-DMA) and consecutive x
            # tiles are contiguous in HBM.
            grid=(grid_d, grid_c),
            in_specs=[
                pl.BlockSpec((kc, vbs, dt), lambda j, i: (i, 0, j)),  # x tile
                pl.BlockSpec((1, 1, dt), lambda j, i: (0, 0, j)),     # gamma
                pl.BlockSpec((1, 1, dt), lambda j, i: (0, 0, j)),     # beta
            ],
            out_specs=pl.BlockSpec((kc, vbs, dt), lambda j, i: (i, 0, j)),
        ),
        compiler_params=pltpu.CompilerParams(
            dimension_semantics=("parallel", "parallel"),
            vmem_limit_bytes=int(vmem_limit),
        ),
        cost_estimate=pl.CostEstimate(
            flops=7 * n_full * vbs * D,
            transcendentals=n_full * D,
            bytes_accessed=2 * n_full * vbs * D * itemsize,
        ),
    )(x3, gamma3, beta3)

    out_main = out3.reshape(n_full * vbs, D)
    if rem == 0:
        return out_main

    # ---- ragged last chunk: its own statistics (torch.chunk semantics) -----
    tail_out = pl.pallas_call(
        _gbn_tail_kernel,
        out_shape=jax.ShapeDtypeStruct((rem, D), x.dtype),
    )(x[n_full * vbs:], gamma.reshape(1, D), beta.reshape(1, D))
    return jnp.concatenate([out_main, tail_out], axis=0)


def gbn_reference(x, gamma, beta, virtual_batch_size=128):
    """Pure-JAX reference matching PyTorch GBN in training mode."""
    B, D = x.shape
    n_chunks = int(math.ceil(B / virtual_batch_size))
    vbs = int(math.ceil(B / n_chunks))
    g = gamma.astype(jnp.float32)
    b = beta.astype(jnp.float32)
    outs = []
    for s in range(0, B, vbs):
        chunk = x[s:s + vbs].astype(jnp.float32)
        mean = jnp.mean(chunk, axis=0, keepdims=True)
        var = jnp.mean((chunk - mean) ** 2, axis=0, keepdims=True)
        y = (chunk - mean) / jnp.sqrt(var + EPS) * g + b
        outs.append(y.astype(x.dtype))
    return jnp.concatenate(outs, axis=0)


if __name__ == "__main__":
    key = jax.random.PRNGKey(0)
    kx, kg, kb = jax.random.split(key, 3)

    def _check(B, D, vb, tag):
        x = jax.random.normal(kx, (B, D), dtype=jnp.float32)
        gamma = 1.0 + 0.1 * jax.random.normal(kg, (D,), dtype=jnp.float32)
        beta = 0.1 * jax.random.normal(kb, (D,), dtype=jnp.float32)
        out = jax.block_until_ready(gbn_forward(x, gamma, beta, virtual_batch_size=vb))
        ref = gbn_reference(x, gamma, beta, virtual_batch_size=vb)
        assert out.shape == (B, D), f"{tag}: bad shape {out.shape}"
        err = float(jnp.max(jnp.abs(out - ref)))
        assert jnp.allclose(out, ref, atol=1e-5, rtol=1e-5), f"{tag}: max abs err {err}"

    # Test 1: D not a multiple of 128 (dt = D, no pad), 4 even ghost batches.
    _check(32, 40, 8, "even/non-lane-dense")
    # Test 2: lane-dense D, vbs not a multiple of 8 (correct, just sublane waste).
    _check(48, 128, 12, "lane-dense")
    # Test 3: ragged last chunk (B=20, vb=8 -> chunks of 7, 7, 6).
    _check(20, 24, 8, "ragged")

    print("KERNEL_OK")
</pallas_src>

<mosaic_0001>
module attributes {stable_mosaic.version = 11 : i64} {
  func.func @_gbn_kernel(%arg0: i32, %arg1: i32, %arg2: memref<2x8x40xf32, #tpu.memory_space<vmem>>, %arg3: memref<1x1x40xf32, #tpu.memory_space<vmem>>, %arg4: memref<1x1x40xf32, #tpu.memory_space<vmem>>, %arg5: memref<2x8x40xf32, #tpu.memory_space<vmem>>) attributes {dimension_semantics = [#tpu.dimension_semantics<parallel>, #tpu.dimension_semantics<parallel>], iteration_bounds = array<i64: 1, 2>, scalar_prefetch = 0 : i64, scratch_operands = 0 : i64, tpu.core_type = #tpu.core_type<tc>, window_params = [{transform_indices = @transform_0, window_bounds = array<i64: 2, 8, 40>}, {transform_indices = @transform_1, window_bounds = array<i64: 1, 1, 40>}, {transform_indices = @transform_2, window_bounds = array<i64: 1, 1, 40>}, {transform_indices = @transform_3, window_bounds = array<i64: 2, 8, 40>}]} {
    %c0 = arith.constant 0 : index
    %c0_0 = arith.constant 0 : index
    %c0_1 = arith.constant 0 : index
    %0 = vector.load %arg2[%c0, %c0_0, %c0_1] : memref<2x8x40xf32, #tpu.memory_space<vmem>>, vector<2x8x40xf32>
    %cst = arith.constant dense<0.000000e+00> : vector<2x40xf32>
    %1 = vector.multi_reduction <add>, %0, %cst [1] : vector<2x8x40xf32> to vector<2x40xf32>
    %2 = vector.shape_cast %1 : vector<2x40xf32> to vector<2x1x40xf32>
    %cst_2 = arith.constant 8.000000e+00 : f32
    %3 = vector.broadcast %cst_2 : f32 to vector<2x1x40xf32>
    %4 = arith.divf %2, %3 : vector<2x1x40xf32>
    %5 = arith.mulf %0, %0 : vector<2x8x40xf32>
    %cst_3 = arith.constant dense<0.000000e+00> : vector<2x40xf32>
    %6 = vector.multi_reduction <add>, %5, %cst_3 [1] : vector<2x8x40xf32> to vector<2x40xf32>
    %7 = vector.shape_cast %6 : vector<2x40xf32> to vector<2x1x40xf32>
    %cst_4 = arith.constant 8.000000e+00 : f32
    %8 = vector.broadcast %cst_4 : f32 to vector<2x1x40xf32>
    %9 = arith.divf %7, %8 : vector<2x1x40xf32>
    %10 = arith.mulf %4, %4 : vector<2x1x40xf32>
    %11 = arith.subf %9, %10 : vector<2x1x40xf32>
    %cst_5 = arith.constant 0.000000e+00 : f32
    %12 = vector.broadcast %cst_5 : f32 to vector<2x1x40xf32>
    %13 = arith.maximumf %11, %12 : vector<2x1x40xf32>
    %cst_6 = arith.constant 9.99999974E-6 : f32
    %14 = vector.broadcast %cst_6 : f32 to vector<2x1x40xf32>
    %15 = arith.addf %13, %14 : vector<2x1x40xf32>
    %16 = math.rsqrt %15 : vector<2x1x40xf32>
    %c0_7 = arith.constant 0 : index
    %c0_8 = arith.constant 0 : index
    %c0_9 = arith.constant 0 : index
    %17 = vector.load %arg3[%c0_7, %c0_8, %c0_9] : memref<1x1x40xf32, #tpu.memory_space<vmem>>, vector<1x1x40xf32>
    %18 = vector.broadcast %17 : vector<1x1x40xf32> to vector<2x1x40xf32>
    %19 = arith.mulf %18, %16 : vector<2x1x40xf32>
    %c0_10 = arith.constant 0 : index
    %c0_11 = arith.constant 0 : index
    %c0_12 = arith.constant 0 : index
    %20 = vector.load %arg4[%c0_10, %c0_11, %c0_12] : memref<1x1x40xf32, #tpu.memory_space<vmem>>, vector<1x1x40xf32>
    %21 = arith.mulf %4, %19 : vector<2x1x40xf32>
    %22 = vector.broadcast %20 : vector<1x1x40xf32> to vector<2x1x40xf32>
    %23 = arith.subf %22, %21 : vector<2x1x40xf32>
    %24 = vector.broadcast %19 : vector<2x1x40xf32> to vector<2x8x40xf32>
    %25 = arith.mulf %0, %24 : vector<2x8x40xf32>
    %26 = vector.broadcast %23 : vector<2x1x40xf32> to vector<2x8x40xf32>
    %27 = arith.addf %25, %26 : vector<2x8x40xf32>
    %c0_13 = arith.constant 0 : index
    %c0_14 = arith.constant 0 : index
    %c0_15 = arith.constant 0 : index
    %28 = vector.load %arg5[%c0_13, %c0_14, %c0_15] : memref<2x8x40xf32, #tpu.memory_space<vmem>>, vector<2x8x40xf32>
    tpu.vector_store %arg5[%c0_13, %c0_14, %c0_15], %27 {strides = array<i32>} : memref<2x8x40xf32, #tpu.memory_space<vmem>>, vector<2x8x40xf32>,
    return
  }
  func.func @transform_0(%arg0: i32, %arg1: i32) -> (i32, i32, i32) {
    %c0_i32 = arith.constant 0 : i32
    %c0_i32_0 = arith.constant 0 : i32
    return %arg1, %c0_i32, %arg0 : i32, i32, i32
  }
  func.func @transform_1(%arg0: i32, %arg1: i32) -> (i32, i32, i32) {
    %c0_i32 = arith.constant 0 : i32
    %c0_i32_0 = arith.constant 0 : i32
    %c0_i32_1 = arith.constant 0 : i32
    return %c0_i32, %c0_i32_0, %arg0 : i32, i32, i32
  }
  func.func @transform_2(%arg0: i32, %arg1: i32) -> (i32, i32, i32) {
    %c0_i32 = arith.constant 0 : i32
    %c0_i32_0 = arith.constant 0 : i32
    %c0_i32_1 = arith.constant 0 : i32
    return %c0_i32, %c0_i32_0, %arg0 : i32, i32, i32
  }
  func.func @transform_3(%arg0: i32, %arg1: i32) -> (i32, i32, i32) {
    %c0_i32 = arith.constant 0 : i32
    %c0_i32_0 = arith.constant 0 : i32
    return %arg1, %c0_i32, %arg0 : i32, i32, i32
  }
}

</mosaic_0001>

<llo_original>
// kernel: tpu_custom_call.1
$region0: #{tpu_custom_call.1}
  #allocation0 [shape = 'u32[]', space=smem, size = 0x4, offset = 0x4, fixed_abs, tag = 'smem constant byte address 0x4 - core index']
  #allocation1 [shape = 'u32[144,128]{1,0:T(1,128)}', space=vmem, size = 0x12000, scoped, tag = 'internal scratch']
  %s0 = inlined_call_operand.hbm [shape: f32[4,8,40], index: 0, kind: input, shape index: {}]
  %s1 = inlined_call_operand.vmem [shape: f32[1,1,40], index: 1, kind: input, shape index: {}]
  %s2 = inlined_call_operand.vmem [shape: f32[1,1,40], index: 2, kind: input, shape index: {}]
  %s3 = inlined_call_operand.hbm [shape: f32[4,8,40], index: 3, kind: output, shape index: {}]
  %s4 = sld [smem:[#allocation0]]
  $region49: #{tpu_custom_call.1} parent=0
    _
  %s6 = ssub.s32 1, %s4
  %s7 = scalar_select 0, %s6, %s4
  $region1: #{tpu_custom_call.1} parent=0
    #allocation2 [shape = 'u8[16384]{0}', space=vmem, size = 0x4000, scoped, tag = 'input window, operand 0']
    #allocation3 [shape = 's32[2]{0}', space=sflag, size = 0x8, scoped, tag = 'scoped memory for tpu_custom_call.1']
    #allocation4 [shape = 's32[2]{0}', space=sflag, size = 0x8, scoped, tag = 'scoped memory for tpu_custom_call.1']
    #allocation5 [shape = 'u8[16384]{0}', space=vmem, size = 0x4000, scoped, tag = 'output window, operand 0']
    %8 = vsyncpa [#allocation3], 0
    %s9 = scalar_lea.sflag [#allocation3], 1
    %10 = vsyncpa %s9, 0
    %11 = vsyncpa [#allocation4], 0
    %s12 = scalar_lea.sflag [#allocation4], 1
    %13 = vsyncpa %s12, 0
    loop: start=0, step=1, limit=4
    $region2: #{tpu_custom_call.1} parent=1 // loop_pre_header
      _
    $region3: #{tpu_custom_call.1} parent=1 // loop_header
      %s15 = sphi 0, %s19
      %p16 = scmp.ge.s32.totalorder %s15, 4
      %s22 = sphi 0, %s34
      %s23 = sphi 0, %s30
      %s24 = sphi 0, %s22
      %s25 = sphi 0, %s23
      %s26 = sphi 0, %s24
      %s27 = sphi 0, %s25
      %s39 = sphi 0, %s41
      %s42 = sphi 0, %s39
      %s43 = sphi 0, %s42
      %s59 = sphi 0, %s43
      %s65 = sphi 0, %s67
      %s68 = sphi 0, %s65
      %s69 = sphi 0, %s68
      %s85 = sphi 0, %s69
      %s91 = sphi 0, %s93
      %s94 = sphi 0, %s91
      %s95 = sphi 0, %s94
      %s111 = sphi 0, %s95
      %s119 = sphi 0, %s121
      %s122 = sphi 0, %s119
      %s123 = sphi 0, %s122
      %s139 = sphi 0, %s123
    $region4: #{tpu_custom_call.1} parent=1 // loop_header_branch
      %18 = sbr.rel (%p16) target = $region8
    $region5: #{tpu_custom_call.1} parent=1 // loop_body
      %s20 = ssub.s32 %s15, 1
      %s21 = ssub.s32 %s15, 2
      %s28 = sadd.s32 1, %s23
      %p29 = scmp.ge.s32.totalorder %s28, 2
      %s30 = scalar_select %p29, 0, %s28
      %s31 = sadd.s32 1, %s22
      %s32 = scalar_select %p29, %s31, %s22
      %p33 = scmp.ge.s32.totalorder %s32, 1
      %s34 = scalar_select %p33, 0, %s32
      %s35 = ssub.s32 %s23, %s30
      %s36 = ssub.s32 %s22, %s34
      %s37 = sor.u32 %s35, %s36
      %p38 = scmp.eq.s32.totalorder %s37, 0
      %s40 = sadd.s32 %s39, 1
      %s41 = scalar_select %p38, %s39, %s40
      %p44 = pneg %p38
      %p45 = scmp.eq.s32.totalorder %s15, 1
      %p46 = por %p44, %p45
      %p47 = scmp.ne.s32.totalorder %s39, %s42
      %p48 = scmp.eq.s32.totalorder %s15, 0
      %p49 = por %p47, %p48
      %p50 = scmp.ne.s32.totalorder %s39, %s42
      %p51 = scmp.eq.s32.totalorder %s20, 1
      %p52 = por %p50, %p51
      %p53 = scmp.ne.s32.totalorder %s42, %s43
      %p54 = scmp.eq.s32.totalorder %s20, 0
      %p55 = por %p53, %p54
      %p56 = scmp.ne.s32.totalorder %s42, %s43
      %p57 = scmp.eq.s32.totalorder %s21, 1
      %p58 = por %p56, %p57
      %p60 = scmp.ne.s32.totalorder %s43, %s59
      %p61 = scmp.eq.s32.totalorder %s21, 0
      %p62 = por %p60, %p61
      %s63 = ssub.s32 %s22, %s34
      %p64 = scmp.eq.s32.totalorder %s63, 0
      %s66 = sadd.s32 %s65, 1
      %s67 = scalar_select %p64, %s65, %s66
      %p70 = pneg %p64
      %p71 = scmp.eq.s32.totalorder %s15, 1
      %p72 = por %p70, %p71
      %p73 = scmp.ne.s32.totalorder %s65, %s68
      %p74 = scmp.eq.s32.totalorder %s15, 0
      %p75 = por %p73, %p74
      %p76 = scmp.ne.s32.totalorder %s65, %s68
      %p77 = scmp.eq.s32.totalorder %s20, 1
      %p78 = por %p76, %p77
      %p79 = scmp.ne.s32.totalorder %s68, %s69
      %p80 = scmp.eq.s32.totalorder %s20, 0
      %p81 = por %p79, %p80
      %p82 = scmp.ne.s32.totalorder %s68, %s69
      %p83 = scmp.eq.s32.totalorder %s21, 1
      %p84 = por %p82, %p83
      %p86 = scmp.ne.s32.totalorder %s69, %s85
      %p87 = scmp.eq.s32.totalorder %s21, 0
      %p88 = por %p86, %p87
      %s89 = ssub.s32 %s22, %s34
      %p90 = scmp.eq.s32.totalorder %s89, 0
      %s92 = sadd.s32 %s91, 1
      %s93 = scalar_select %p90, %s91, %s92
      %p96 = pneg %p90
      %p97 = scmp.eq.s32.totalorder %s15, 1
      %p98 = por %p96, %p97
      %p99 = scmp.ne.s32.totalorder %s91, %s94
      %p100 = scmp.eq.s32.totalorder %s15, 0
      %p101 = por %p99, %p100
      %p102 = scmp.ne.s32.totalorder %s91, %s94
      %p103 = scmp.eq.s32.totalorder %s20, 1
      %p104 = por %p102, %p103
      %p105 = scmp.ne.s32.totalorder %s94, %s95
      %p106 = scmp.eq.s32.totalorder %s20, 0
      %p107 = por %p105, %p106
      %p108 = scmp.ne.s32.totalorder %s94, %s95
      %p109 = scmp.eq.s32.totalorder %s21, 1
      %p110 = por %p108, %p109
      %p112 = scmp.ne.s32.totalorder %s95, %s111
      %p113 = scmp.eq.s32.totalorder %s21, 0
      %p114 = por %p112, %p113
      %s115 = ssub.s32 %s23, %s30
      %s116 = ssub.s32 %s22, %s34
      %s117 = sor.u32 %s115, %s116
      %p118 = scmp.eq.s32.totalorder %s117, 0
      %s120 = sadd.s32 %s119, 1
      %s121 = scalar_select %p118, %s119, %s120
      %p124 = pneg %p118
      %p125 = scmp.eq.s32.totalorder %s15, 1
      %p126 = por %p124, %p125
      %p127 = scmp.ne.s32.totalorder %s119, %s122
      %p128 = scmp.eq.s32.totalorder %s15, 0
      %p129 = por %p127, %p128
      %p130 = scmp.ne.s32.totalorder %s119, %s122
      %p131 = scmp.eq.s32.totalorder %s20, 1
      %p132 = por %p130, %p131
      %p133 = scmp.ne.s32.totalorder %s122, %s123
      %p134 = scmp.eq.s32.totalorder %s20, 0
      %p135 = por %p133, %p134
      %p136 = scmp.ne.s32.totalorder %s122, %s123
      %p137 = scmp.eq.s32.totalorder %s21, 1
      %p138 = por %p136, %p137
      %p140 = scmp.ne.s32.totalorder %s123, %s139
      %p141 = scmp.eq.s32.totalorder %s21, 0
      %p142 = por %p140, %p141
      %p143 = scmp.le.s32.totalorder 1, %s15
      %p144 = scmp.lt.s32.totalorder %s15, 3
      %p145 = pnand %p143, %p144
      %p146 = pneg %p145
      // Predicated region
      $region9: #{tpu_custom_call.1} parent=5 // pred_check
        _
      $region10: #{tpu_custom_call.1} parent=5 // pred_check_branch
        %148 = sbr.rel (%p145) target = $region12
      $region11: #{tpu_custom_call.1} parent=5 // pred_region
        %s149 = ssub.s32 %s15, 1
        // Predicated region
        $region13: #{tpu_custom_call.1} parent=11 // pred_check
          %p150 = pneg %p81
        $region14: #{tpu_custom_call.1} parent=11 // pred_check_branch
          %152 = sbr.rel (%p150) target = $region16
        $region15: #{tpu_custom_call.1} parent=11 // pred_region
          %p153 = scmp.lt.s32.totalorder %s24, 0
          %s154 = scalar_select %p153, %s24, 0
          %s155 = scalar_lea.vmem %s1, %s154
        $region16: #{tpu_custom_call.1} parent=11 // pred_fallthru
          _
        // Predicated region
        $region17: #{tpu_custom_call.1} parent=11 // pred_check
          %p156 = pneg %p107
        $region18: #{tpu_custom_call.1} parent=11 // pred_check_branch
          %158 = sbr.rel (%p156) target = $region20
        $region19: #{tpu_custom_call.1} parent=11 // pred_region
          %p159 = scmp.lt.s32.totalorder %s24, 0
          %s160 = scalar_select %p159, %s24, 0
          %s161 = scalar_lea.vmem %s2, %s160
        $region20: #{tpu_custom_call.1} parent=11 // pred_fallthru
          _
      $region12: #{tpu_custom_call.1} parent=5 // pred_fallthru
        _
      %p162 = scmp.lt.s32.totalorder %s15, 2
      // Predicated region
      $region21: #{tpu_custom_call.1} parent=5 // pred_check
        %p163 = pneg %p162
      $region22: #{tpu_custom_call.1} parent=5 // pred_check_branch
        %165 = sbr.rel (%p163) target = $region24
      $region23: #{tpu_custom_call.1} parent=5 // pred_region
        // Predicated region
        $region25: #{tpu_custom_call.1} parent=23 // pred_check
          %p166 = pneg %p49
        $region26: #{tpu_custom_call.1} parent=23 // pred_check_branch
          %168 = sbr.rel (%p166) target = $region28
        $region27: #{tpu_custom_call.1} parent=23 // pred_region
          %s169 = sand.u32 %s39, 1
          %s170 = scalar_lea.sflag [#allocation3], %s169
          %s171 = sand.u32 %s39, 1
          %s172 = smul.addr %s171, 16
          %s173 = scalar_lea.vmem [#allocation2], %s172
          %s174 = smul.u32 2, %s23
          %s176 = ssub.s32 256, 256
          %177 = vsyncadd %s170, %s176
          %s178 = sadd.s32 %s22, %s174
          %s179 = smul.addr %s178, 128
          %s180 = scalar_lea.hbm %s0, %s179
          %s181 = sshll.u32 %s173, 4
          %s182 = int_to_ptr.vmem [resolvable:$true] %s181
          %187 = dma.hbm_to_vmem [thread:$0]  %s180, 256, %s182, %s170, 128, 128, 8
        $region28: #{tpu_custom_call.1} parent=23 // pred_fallthru
          _
      $region24: #{tpu_custom_call.1} parent=5 // pred_fallthru
        _
      %p188 = scmp.le.s32.totalorder 1, %s15
      %p189 = scmp.lt.s32.totalorder %s15, 3
      %p190 = pnand %p188, %p189
      %p191 = pneg %p190
      // Predicated region
      $region29: #{tpu_custom_call.1} parent=5 // pred_check
        _
      $region30: #{tpu_custom_call.1} parent=5 // pred_check_branch
        %193 = sbr.rel (%p190) target = $region32
      $region31: #{tpu_custom_call.1} parent=5 // pred_region
        %s194 = ssub.s32 %s15, 1
        %s195 = sand.u32 %s42, 1
        %s196 = scalar_lea.sflag [#allocation3], %s195
        %s197 = sand.u32 %s42, 1
        %s198 = smul.addr %s197, 16
        %s199 = scalar_lea.vmem [#allocation2], %s198
        // Predicated region
        $region33: #{tpu_custom_call.1} parent=31 // pred_check
          %p200 = pneg %p55
        $region34: #{tpu_custom_call.1} parent=31 // pred_check_branch
          %202 = sbr.rel (%p200) target = $region36
        $region35: #{tpu_custom_call.1} parent=31 // pred_region
          %203 = dma.done %s196, 256
        $region36: #{tpu_custom_call.1} parent=31 // pred_fallthru
          _
        %s204 = sand.u32 %s42, 1
        %s205 = scalar_lea.sflag [#allocation3], %s204
        %s206 = sand.u32 %s42, 1
        %s207 = smul.addr %s206, 16
        %s208 = scalar_lea.vmem [#allocation2], %s207
        %p209 = pneg %p55
        %p210 = pneg %p52
        %p211 = scmp.lt.s32.totalorder %s24, 0
        %s212 = scalar_select %p211, %s24, 0
        %s213 = scalar_lea.vmem %s1, %s212
        %p214 = pneg %p81
        %p215 = pneg %p78
        %p216 = scmp.lt.s32.totalorder %s24, 0
        %s217 = scalar_select %p216, %s24, 0
        %s218 = scalar_lea.vmem %s2, %s217
        %p219 = pneg %p107
        %p220 = pneg %p104
        %p221 = pneg %p135
        %p222 = pneg %p132
        %s223 = sand.u32 %s122, 1
        %s224 = scalar_lea.sflag [#allocation4], %s223
        %s225 = sand.u32 %s122, 1
        %s226 = smul.addr %s225, 16
        %s227 = scalar_lea.vmem [#allocation5], %s226
        %s228 = smul.u32 2, %s25
        %p229 = scmp.lt.s32.totalorder %s24, 0
        %s230 = scalar_select %p229, %s24, 0
        %s231 = scalar_lea.vmem %s1, %s230
        %p232 = scmp.lt.s32.totalorder %s24, 0
        %s233 = scalar_select %p232, %s24, 0
        %s234 = scalar_lea.vmem %s2, %s233
        %s235 = smul.u32 2, %s25
        %v236 = vld [vmem:[%s199] sm:$0xff]
        %v237 = vld [vmem:[%s199 + $0x8] sm:$0xff]
        %vm238 = vcmask 326656
        %v239 = vsel %vm238, %v236, 0.0
        %v240 = vrot.slane %v239, 4
        %v241 = vadd.f32 %v239, %v240
        %v242 = vrot.slane %v241, 2
        %v243 = vadd.f32 %v241, %v242
        %v244 = vrot.slane %v243, 1
        %v245 = vadd.f32 %v243, %v244
        %v246 = vsel %vm238, %v237, 0.0
        %v247 = vrot.slane %v246, 4
        %v248 = vadd.f32 %v246, %v247
        %v249 = vrot.slane %v248, 2
        %v250 = vadd.f32 %v248, %v249
        %v251 = vrot.slane %v250, 1
        %v252 = vadd.f32 %v250, %v251
        %v253 = vrcp.pop 8.0
        %v254 = vmul.f32 %v245, %v253
        %v255 = vmul.f32 %v252, %v253
        %v256 = vmul.f32 %v236, %v236
        %v257 = vmul.f32 %v237, %v237
        %v258 = vsel %vm238, %v256, 0.0
        %v259 = vrot.slane %v258, 4
        %v260 = vadd.f32 %v258, %v259
        %v261 = vrot.slane %v260, 2
        %v262 = vadd.f32 %v260, %v261
        %v263 = vrot.slane %v262, 1
        %v264 = vadd.f32 %v262, %v263
        %v265 = vsel %vm238, %v257, 0.0
        %v266 = vrot.slane %v265, 4
        %v267 = vadd.f32 %v265, %v266
        %v268 = vrot.slane %v267, 2
        %v269 = vadd.f32 %v267, %v268
        %v270 = vrot.slane %v269, 1
        %v271 = vadd.f32 %v269, %v270
        %v272 = vmul.f32 %v264, %v253
        %v273 = vmul.f32 %v271, %v253
        %v274 = vmul.f32 %v254, %v254
        %v275 = vmul.f32 %v255, %v255
        %v276 = vsub.f32 %v272, %v274
        %v277 = vsub.f32 %v273, %v275
        %v278 = vmax.f32 %v276, 0.0
        %v279 = vmax.f32 %v277, 0.0
        %v280 = vadd.f32 %v278, 1e-05
        %v281 = vadd.f32 %v279, 1e-05
        %v282 = vrsqrt.pop %v280
        %v283 = vrsqrt.pop %v281
        %v284 = vld [vmem:[%s231] sm:$0x1]
        %v285 = vmul.f32 %v284, %v282
        %v286 = vmul.f32 %v284, %v283
        %v287 = vld [vmem:[%s234] sm:$0x1]
        %v288 = vmul.f32 %v254, %v285
        %v289 = vmul.f32 %v255, %v286
        %v290 = vsub.f32 %v287, %v288
        %v291 = vsub.f32 %v287, %v289
        %v294 = vlaneseq
        %v295 = vshrl.u32 %v294, 7
        %v296 = vsub.s32 0, %v295
        %v297 = vrot.slane %v285, %v296
        %v298 = vlaneseq
        %v299 = vshrl.u32 %v298, 7
        %v300 = vsub.s32 0, %v299
        %v301 = vrot.slane %v286, %v300
        %v304 = vmul.f32 %v236, %v297
        %v305 = vmul.f32 %v237, %v301
        %v308 = vlaneseq
        %v309 = vshrl.u32 %v308, 7
        %v310 = vsub.s32 0, %v309
        %v311 = vrot.slane %v290, %v310
        %v312 = vlaneseq
        %v313 = vshrl.u32 %v312, 7
        %v314 = vsub.s32 0, %v313
        %v315 = vrot.slane %v291, %v314
        %v318 = vadd.f32 %v304, %v311
        %v319 = vadd.f32 %v305, %v315
        %320 = vst.msk [vmem:[%s227] sm:$0xff] %vm238, %v318
        %321 = vst.msk [vmem:[%s227 + $0x8] sm:$0xff] %vm238, %v319
        %s322 = sand.u32 %s122, 1
        %s323 = scalar_lea.sflag [#allocation4], %s322
        %s324 = sand.u32 %s122, 1
        %s325 = smul.addr %s324, 16
        %s326 = scalar_lea.vmem [#allocation5], %s325
        // Predicated region
        $region37: #{tpu_custom_call.1} parent=31 // pred_check
          %p327 = pneg %p132
        $region38: #{tpu_custom_call.1} parent=31 // pred_check_branch
          %329 = sbr.rel (%p327) target = $region40
        $region39: #{tpu_custom_call.1} parent=31 // pred_region
          %s330 = smul.u32 2, %s25
          %s332 = ssub.s32 256, 256
          %333 = vsyncadd %s323, %s332
          %s334 = sadd.s32 %s24, %s330
          %s335 = smul.addr %s334, 128
          %s336 = scalar_lea.hbm %s3, %s335
          %s337 = sshll.u32 %s326, 4
          %s338 = int_to_ptr.vmem [resolvable:$true] %s337
          %343 = dma.vmem_to_hbm [thread:$0]  %s338, 256, %s336, %s323, 128, 128, 8
        $region40: #{tpu_custom_call.1} parent=31 // pred_fallthru
          _
      $region32: #{tpu_custom_call.1} parent=5 // pred_fallthru
        _
      %p344 = scmp.le.s32.totalorder 2, %s15
      // Predicated region
      $region41: #{tpu_custom_call.1} parent=5 // pred_check
        %p345 = pneg %p344
      $region42: #{tpu_custom_call.1} parent=5 // pred_check_branch
        %347 = sbr.rel (%p345) target = $region44
      $region43: #{tpu_custom_call.1} parent=5 // pred_region
        %s348 = ssub.s32 %s15, 2
        // Predicated region
        $region45: #{tpu_custom_call.1} parent=43 // pred_check
          %p349 = pneg %p138
        $region46: #{tpu_custom_call.1} parent=43 // pred_check_branch
          %351 = sbr.rel (%p349) target = $region48
        $region47: #{tpu_custom_call.1} parent=43 // pred_region
          %s352 = sand.u32 %s123, 1
          %s353 = scalar_lea.sflag [#allocation4], %s352
          %s354 = sand.u32 %s123, 1
          %s355 = smul.addr %s354, 16
          %s356 = scalar_lea.vmem [#allocation5], %s355
          %357 = dma.done %s353, 256
        $region48: #{tpu_custom_call.1} parent=43 // pred_fallthru
          _
      $region44: #{tpu_custom_call.1} parent=5 // pred_fallthru
        _
    $region6: #{tpu_custom_call.1} parent=1 // loop_footer
      %s19 = sadd.s32 1, %s15
    $region7: #{tpu_custom_call.1} parent=1 // loop_footer_branch
      %14 = sbr.rel target = $region3
    $region8: #{tpu_custom_call.1} parent=1 // loop_exit
      _
    %358 = vsyncpa [#allocation3], 1
    %s359 = scalar_lea.sflag [#allocation3], 1
    %360 = vsyncpa %s359, 1
    %361 = vsyncpa [#allocation4], 1
    %s362 = scalar_lea.sflag [#allocation4], 1
    %363 = vsyncpa %s362, 1

</llo_original>
